<compile_context>
chip_gen: v7x
topology: tpu7x:2x2x1
jax: 0.10.0
libtpu: 0.0.40
codegen_flags: <defaults>
</compile_context>

<pallas_src>
import functools

import jax
import jax.numpy as jnp
from jax import lax
from jax.experimental import pallas as pl
from jax.experimental.pallas import tpu as pltpu


def _lstm_last_kernel(T, Bp, H,
                      x_ref, wih_ref, whh_ref, b_ref, wmlp_ref, bmlp_ref,
                      out_ref, xz_scr):
    """Single-invocation LSTM recurrence + final Linear.

    x_ref    : (T*Bp, D)     time-major, batch padded to Bp rows per step
    wih_ref  : (D, 4H)       W_ih^T
    whh_ref  : (H, 4H)       W_hh^T
    b_ref    : (1, 4H)       b_ih + b_hh
    wmlp_ref : (H, Op)       Linear weight^T, lane-padded to Op
    bmlp_ref : (1, Op)       Linear bias, lane-padded
    out_ref  : (Bp, Op)      padded output (last timestep only)
    xz_scr   : (T, Bp, 4H)   f32 VMEM scratch for the hoisted input projection
    """
    # Prologue: one MXU matmul for the non-recurrent projection of ALL steps,
    # bias folded in. Reshape (T*Bp, 4H) -> (T, Bp, 4H) is tile-aligned (Bp
    # is a multiple of 8), i.e. free.
    xz = (jnp.dot(x_ref[...], wih_ref[...], preferred_element_type=jnp.float32)
          + b_ref[...])
    xz_scr[...] = xz.reshape(T, Bp, 4 * H)

    whh = whh_ref[...]                       # loop-invariant weight load
    h = jnp.zeros((Bp, H), jnp.float32)
    c = jnp.zeros((Bp, H), jnp.float32)

    # Statically unrolled time loop (T is small): only h @ W_hh^T is serial.
    for t in range(T):
        # Static leading-axis index -> one aligned (Bp, 4H) tile load.
        z = xz_scr[t] + jnp.dot(h, whh, preferred_element_type=jnp.float32)

        # One whole-vreg sigmoid push; tanh only where needed (g gate, cell).
        sz = jax.nn.sigmoid(z)
        i_g = sz[:, 0 * H:1 * H]
        f_g = sz[:, 1 * H:2 * H]
        o_g = sz[:, 3 * H:4 * H]
        g_g = jnp.tanh(z[:, 2 * H:3 * H])

        c = f_g * c + i_g * g_g
        h = o_g * jnp.tanh(c)

    # Final Linear on the last hidden state; output lanes padded to Op so the
    # store is a full, unmasked vst.
    y = (jnp.dot(h, wmlp_ref[...], preferred_element_type=jnp.float32)
         + bmlp_ref[...])
    out_ref[...] = y.astype(out_ref.dtype)


@jax.jit
def mylstm_forward(x, w_ih, w_hh, b_ih, b_hh, w_mlp, b_mlp):
    """x: (B, T, D) batch_first, like the PyTorch module. Returns (B, out_size)."""
    B, T, D = x.shape
    H = w_ih.shape[0] // 4
    O = w_mlp.shape[0]

    Bp = ((B + 7) // 8) * 8          # pad batch to a sublane multiple (free)
    Op = ((O + 127) // 128) * 128    # pad output lanes for a lane-dense store

    # Time-major, batch-padded, flattened to (T*Bp, D) for the hoisted matmul.
    x_tm = jnp.transpose(x, (1, 0, 2)).astype(jnp.float32)        # (T, B, D)
    x_tm = jnp.pad(x_tm, ((0, 0), (0, Bp - B), (0, 0)))           # (T, Bp, D)
    x2d = x_tm.reshape(T * Bp, D)

    wih_t = w_ih.T.astype(jnp.float32)                            # (D, 4H)
    whh_t = w_hh.T.astype(jnp.float32)                            # (H, 4H)
    bias = (b_ih + b_hh).astype(jnp.float32).reshape(1, 4 * H)    # (1, 4H)
    wmlp_t = jnp.pad(w_mlp.T.astype(jnp.float32),
                     ((0, 0), (0, Op - O)))                       # (H, Op)
    bmlp = jnp.pad(b_mlp.astype(jnp.float32),
                   ((0, Op - O),)).reshape(1, Op)                 # (1, Op)

    kernel = functools.partial(_lstm_last_kernel, T, Bp, H)

    out_pad = pl.pallas_call(
        kernel,
        out_shape=jax.ShapeDtypeStruct((Bp, Op), jnp.float32),
        # No grid: single invocation, every operand lives whole in VMEM
        # (weights DMA'd exactly once, no per-step double-buffering).
        in_specs=[pl.BlockSpec(memory_space=pltpu.MemorySpace.VMEM)] * 6,
        out_specs=pl.BlockSpec(memory_space=pltpu.MemorySpace.VMEM),
        scratch_shapes=[pltpu.VMEM((T, Bp, 4 * H), jnp.float32)],
    )(x2d, wih_t, whh_t, bias, wmlp_t, bmlp)

    return out_pad[:B, :O].astype(x.dtype)


def reference_forward(x, w_ih, w_hh, b_ih, b_hh, w_mlp, b_mlp):
    """Pure-JAX reference matching torch.nn.LSTM (gate order i,f,g,o)."""
    B, T, D = x.shape
    H = w_hh.shape[1]

    def step(carry, x_t):
        h, c = carry
        z = x_t @ w_ih.T + b_ih + h @ w_hh.T + b_hh
        i = jax.nn.sigmoid(z[:, 0 * H:1 * H])
        f = jax.nn.sigmoid(z[:, 1 * H:2 * H])
        g = jnp.tanh(z[:, 2 * H:3 * H])
        o = jax.nn.sigmoid(z[:, 3 * H:4 * H])
        c = f * c + i * g
        h = o * jnp.tanh(c)
        return (h, c), h

    h0 = jnp.zeros((B, H), jnp.float32)
    c0 = jnp.zeros((B, H), jnp.float32)
    (h_last, _), _ = lax.scan(step, (h0, c0), jnp.transpose(x, (1, 0, 2)))
    return h_last @ w_mlp.T + b_mlp


def init_params(key, in_size=32, h_size=32, out_size=1):
    """Deterministic parameter init mirroring the module's __init__ shapes."""
    k1, k2, k3, k4, k5 = jax.random.split(key, 5)
    # nn.LSTM default init: U(-1/sqrt(H), 1/sqrt(H))
    bound = 1.0 / jnp.sqrt(jnp.float32(h_size))
    w_ih = jax.random.uniform(k1, (4 * h_size, in_size), jnp.float32, -bound, bound)
    w_hh = jax.random.uniform(k2, (4 * h_size, h_size), jnp.float32, -bound, bound)
    b_ih = jax.random.uniform(k3, (4 * h_size,), jnp.float32, -bound, bound)
    b_hh = jax.random.uniform(k4, (4 * h_size,), jnp.float32, -bound, bound)
    # nn.Linear: xavier_uniform_ weight, bias filled with 0.01
    limit = jnp.sqrt(6.0 / (h_size + out_size))
    w_mlp = jax.random.uniform(k5, (out_size, h_size), jnp.float32, -limit, limit)
    b_mlp = jnp.full((out_size,), 0.01, jnp.float32)
    return w_ih, w_hh, b_ih, b_hh, w_mlp, b_mlp


if __name__ == "__main__":
    B, T, IN, H, OUT = 2, 8, 32, 32, 1
    key = jax.random.PRNGKey(0)
    kx, kp = jax.random.split(key)
    x = jax.random.normal(kx, (B, T, IN), jnp.float32)
    params = init_params(kp, in_size=IN, h_size=H, out_size=OUT)

    out = mylstm_forward(x, *params)
    out = jax.block_until_ready(out)

    ref = reference_forward(x, *params)
    assert out.shape == (B, OUT), out.shape
    assert jnp.allclose(out, ref, atol=1e-5, rtol=1e-5), (out, ref)
    print("KERNEL_OK")
</pallas_src>

<mosaic_0001>
module attributes {stable_mosaic.version = 11 : i64} {
  func.func @_lstm_last_kernel(%arg0: memref<64x32xf32, #tpu.memory_space<vmem>>, %arg1: memref<32x128xf32, #tpu.memory_space<vmem>>, %arg2: memref<32x128xf32, #tpu.memory_space<vmem>>, %arg3: memref<1x128xf32, #tpu.memory_space<vmem>>, %arg4: memref<32x128xf32, #tpu.memory_space<vmem>>, %arg5: memref<1x128xf32, #tpu.memory_space<vmem>>, %arg6: memref<8x128xf32, #tpu.memory_space<vmem>>, %arg7: memref<8x8x128xf32, #tpu.memory_space<vmem>>) attributes {dimension_semantics = [], scalar_prefetch = 0 : i64, scratch_operands = 1 : i64, tpu.core_type = #tpu.core_type<tc>} {
    %c0 = arith.constant 0 : index
    %c0_0 = arith.constant 0 : index
    %0 = vector.load %arg0[%c0, %c0_0] : memref<64x32xf32, #tpu.memory_space<vmem>>, vector<64x32xf32>
    %c0_1 = arith.constant 0 : index
    %c0_2 = arith.constant 0 : index
    %1 = vector.load %arg1[%c0_1, %c0_2] : memref<32x128xf32, #tpu.memory_space<vmem>>, vector<32x128xf32>
    %cst = arith.constant dense<0.000000e+00> : vector<64x128xf32>
    %2 = tpu.matmul %0, %1, %cst {dimension_numbers = #tpu.dot_dimension_numbers<[1], [0], [0], [1], [0, 0, 1, 1], [], []>} : vector<64x32xf32>, vector<32x128xf32>, vector<64x128xf32> -> vector<64x128xf32>
    %c0_3 = arith.constant 0 : index
    %c0_4 = arith.constant 0 : index
    %3 = vector.load %arg3[%c0_3, %c0_4] : memref<1x128xf32, #tpu.memory_space<vmem>>, vector<1x128xf32>
    %4 = vector.broadcast %3 : vector<1x128xf32> to vector<64x128xf32>
    %5 = arith.addf %2, %4 : vector<64x128xf32>
    %6 = vector.shape_cast %5 : vector<64x128xf32> to vector<8x8x128xf32>
    %c0_5 = arith.constant 0 : index
    %c0_6 = arith.constant 0 : index
    %c0_7 = arith.constant 0 : index
    %7 = vector.load %arg7[%c0_5, %c0_6, %c0_7] : memref<8x8x128xf32, #tpu.memory_space<vmem>>, vector<8x8x128xf32>
    tpu.vector_store %arg7[%c0_5, %c0_6, %c0_7], %6 {strides = array<i32>} : memref<8x8x128xf32, #tpu.memory_space<vmem>>, vector<8x8x128xf32>,
    %c0_8 = arith.constant 0 : index
    %c0_9 = arith.constant 0 : index
    %8 = vector.load %arg2[%c0_8, %c0_9] : memref<32x128xf32, #tpu.memory_space<vmem>>, vector<32x128xf32>
    %cst_10 = arith.constant 0.000000e+00 : f32
    %9 = vector.broadcast %cst_10 : f32 to vector<8x32xf32>
    %cst_11 = arith.constant 0.000000e+00 : f32
    %10 = vector.broadcast %cst_11 : f32 to vector<8x32xf32>
    %c0_12 = arith.constant 0 : index
    %c0_13 = arith.constant 0 : index
    %c0_14 = arith.constant 0 : index
    %11 = vector.load %arg7[%c0_12, %c0_13, %c0_14] : memref<8x8x128xf32, #tpu.memory_space<vmem>>, vector<1x8x128xf32>
    %12 = vector.shape_cast %11 : vector<1x8x128xf32> to vector<8x128xf32>
    %cst_15 = arith.constant dense<0.000000e+00> : vector<8x128xf32>
    %13 = tpu.matmul %9, %8, %cst_15 {dimension_numbers = #tpu.dot_dimension_numbers<[1], [0], [0], [1], [0, 0, 1, 1], [], []>} : vector<8x32xf32>, vector<32x128xf32>, vector<8x128xf32> -> vector<8x128xf32>
    %14 = arith.addf %12, %13 : vector<8x128xf32>
    %15 = arith.negf %14 : vector<8x128xf32>
    %16 = math.exp %15 : vector<8x128xf32>
    %cst_16 = arith.constant 1.000000e+00 : f32
    %17 = vector.broadcast %cst_16 : f32 to vector<8x128xf32>
    %18 = arith.addf %17, %16 : vector<8x128xf32>
    %19 = arith.divf %17, %18 : vector<8x128xf32>
    %20 = vector.extract_strided_slice %19 {offsets = [0, 0], sizes = [8, 32], strides = [1, 1]} : vector<8x128xf32> to vector<8x32xf32>
    %21 = vector.extract_strided_slice %19 {offsets = [0, 32], sizes = [8, 32], strides = [1, 1]} : vector<8x128xf32> to vector<8x32xf32>
    %22 = vector.extract_strided_slice %19 {offsets = [0, 96], sizes = [8, 32], strides = [1, 1]} : vector<8x128xf32> to vector<8x32xf32>
    %23 = vector.extract_strided_slice %14 {offsets = [0, 64], sizes = [8, 32], strides = [1, 1]} : vector<8x128xf32> to vector<8x32xf32>
    %24 = math.tanh %23 : vector<8x32xf32>
    %25 = arith.mulf %21, %10 : vector<8x32xf32>
    %26 = arith.mulf %20, %24 : vector<8x32xf32>
    %27 = arith.addf %25, %26 : vector<8x32xf32>
    %28 = math.tanh %27 : vector<8x32xf32>
    %29 = arith.mulf %22, %28 : vector<8x32xf32>
    %c1 = arith.constant 1 : index
    %c0_17 = arith.constant 0 : index
    %c0_18 = arith.constant 0 : index
    %30 = vector.load %arg7[%c1, %c0_17, %c0_18] : memref<8x8x128xf32, #tpu.memory_space<vmem>>, vector<1x8x128xf32>
    %31 = vector.shape_cast %30 : vector<1x8x128xf32> to vector<8x128xf32>
    %cst_19 = arith.constant dense<0.000000e+00> : vector<8x128xf32>
    %32 = tpu.matmul %29, %8, %cst_19 {dimension_numbers = #tpu.dot_dimension_numbers<[1], [0], [0], [1], [0, 0, 1, 1], [], []>} : vector<8x32xf32>, vector<32x128xf32>, vector<8x128xf32> -> vector<8x128xf32>
    %33 = arith.addf %31, %32 : vector<8x128xf32>
    %34 = arith.negf %33 : vector<8x128xf32>
    %35 = math.exp %34 : vector<8x128xf32>
    %cst_20 = arith.constant 1.000000e+00 : f32
    %36 = vector.broadcast %cst_20 : f32 to vector<8x128xf32>
    %37 = arith.addf %36, %35 : vector<8x128xf32>
    %38 = arith.divf %36, %37 : vector<8x128xf32>
    %39 = vector.extract_strided_slice %38 {offsets = [0, 0], sizes = [8, 32], strides = [1, 1]} : vector<8x128xf32> to vector<8x32xf32>
    %40 = vector.extract_strided_slice %38 {offsets = [0, 32], sizes = [8, 32], strides = [1, 1]} : vector<8x128xf32> to vector<8x32xf32>
    %41 = vector.extract_strided_slice %38 {offsets = [0, 96], sizes = [8, 32], strides = [1, 1]} : vector<8x128xf32> to vector<8x32xf32>
    %42 = vector.extract_strided_slice %33 {offsets = [0, 64], sizes = [8, 32], strides = [1, 1]} : vector<8x128xf32> to vector<8x32xf32>
    %43 = math.tanh %42 : vector<8x32xf32>
    %44 = arith.mulf %40, %27 : vector<8x32xf32>
    %45 = arith.mulf %39, %43 : vector<8x32xf32>
    %46 = arith.addf %44, %45 : vector<8x32xf32>
    %47 = math.tanh %46 : vector<8x32xf32>
    %48 = arith.mulf %41, %47 : vector<8x32xf32>
    %c2 = arith.constant 2 : index
    %c0_21 = arith.constant 0 : index
    %c0_22 = arith.constant 0 : index
    %49 = vector.load %arg7[%c2, %c0_21, %c0_22] : memref<8x8x128xf32, #tpu.memory_space<vmem>>, vector<1x8x128xf32>
    %50 = vector.shape_cast %49 : vector<1x8x128xf32> to vector<8x128xf32>
    %cst_23 = arith.constant dense<0.000000e+00> : vector<8x128xf32>
    %51 = tpu.matmul %48, %8, %cst_23 {dimension_numbers = #tpu.dot_dimension_numbers<[1], [0], [0], [1], [0, 0, 1, 1], [], []>} : vector<8x32xf32>, vector<32x128xf32>, vector<8x128xf32> -> vector<8x128xf32>
    %52 = arith.addf %50, %51 : vector<8x128xf32>
    %53 = arith.negf %52 : vector<8x128xf32>
    %54 = math.exp %53 : vector<8x128xf32>
    %cst_24 = arith.constant 1.000000e+00 : f32
    %55 = vector.broadcast %cst_24 : f32 to vector<8x128xf32>
    %56 = arith.addf %55, %54 : vector<8x128xf32>
    %57 = arith.divf %55, %56 : vector<8x128xf32>
    %58 = vector.extract_strided_slice %57 {offsets = [0, 0], sizes = [8, 32], strides = [1, 1]} : vector<8x128xf32> to vector<8x32xf32>
    %59 = vector.extract_strided_slice %57 {offsets = [0, 32], sizes = [8, 32], strides = [1, 1]} : vector<8x128xf32> to vector<8x32xf32>
    %60 = vector.extract_strided_slice %57 {offsets = [0, 96], sizes = [8, 32], strides = [1, 1]} : vector<8x128xf32> to vector<8x32xf32>
    %61 = vector.extract_strided_slice %52 {offsets = [0, 64], sizes = [8, 32], strides = [1, 1]} : vector<8x128xf32> to vector<8x32xf32>
    %62 = math.tanh %61 : vector<8x32xf32>
    %63 = arith.mulf %59, %46 : vector<8x32xf32>
    %64 = arith.mulf %58, %62 : vector<8x32xf32>
    %65 = arith.addf %63, %64 : vector<8x32xf32>
    %66 = math.tanh %65 : vector<8x32xf32>
    %67 = arith.mulf %60, %66 : vector<8x32xf32>
    %c3 = arith.constant 3 : index
    %c0_25 = arith.constant 0 : index
    %c0_26 = arith.constant 0 : index
    %68 = vector.load %arg7[%c3, %c0_25, %c0_26] : memref<8x8x128xf32, #tpu.memory_space<vmem>>, vector<1x8x128xf32>
    %69 = vector.shape_cast %68 : vector<1x8x128xf32> to vector<8x128xf32>
    %cst_27 = arith.constant dense<0.000000e+00> : vector<8x128xf32>
    %70 = tpu.matmul %67, %8, %cst_27 {dimension_numbers = #tpu.dot_dimension_numbers<[1], [0], [0], [1], [0, 0, 1, 1], [], []>} : vector<8x32xf32>, vector<32x128xf32>, vector<8x128xf32> -> vector<8x128xf32>
    %71 = arith.addf %69, %70 : vector<8x128xf32>
    %72 = arith.negf %71 : vector<8x128xf32>
    %73 = math.exp %72 : vector<8x128xf32>
    %cst_28 = arith.constant 1.000000e+00 : f32
    %74 = vector.broadcast %cst_28 : f32 to vector<8x128xf32>
    %75 = arith.addf %74, %73 : vector<8x128xf32>
    %76 = arith.divf %74, %75 : vector<8x128xf32>
    %77 = vector.extract_strided_slice %76 {offsets = [0, 0], sizes = [8, 32], strides = [1, 1]} : vector<8x128xf32> to vector<8x32xf32>
    %78 = vector.extract_strided_slice %76 {offsets = [0, 32], sizes = [8, 32], strides = [1, 1]} : vector<8x128xf32> to vector<8x32xf32>
    %79 = vector.extract_strided_slice %76 {offsets = [0, 96], sizes = [8, 32], strides = [1, 1]} : vector<8x128xf32> to vector<8x32xf32>
    %80 = vector.extract_strided_slice %71 {offsets = [0, 64], sizes = [8, 32], strides = [1, 1]} : vector<8x128xf32> to vector<8x32xf32>
    %81 = math.tanh %80 : vector<8x32xf32>
    %82 = arith.mulf %78, %65 : vector<8x32xf32>
    %83 = arith.mulf %77, %81 : vector<8x32xf32>
    %84 = arith.addf %82, %83 : vector<8x32xf32>
    %85 = math.tanh %84 : vector<8x32xf32>
    %86 = arith.mulf %79, %85 : vector<8x32xf32>
    %c4 = arith.constant 4 : index
    %c0_29 = arith.constant 0 : index
    %c0_30 = arith.constant 0 : index
    %87 = vector.load %arg7[%c4, %c0_29, %c0_30] : memref<8x8x128xf32, #tpu.memory_space<vmem>>, vector<1x8x128xf32>
    %88 = vector.shape_cast %87 : vector<1x8x128xf32> to vector<8x128xf32>
    %cst_31 = arith.constant dense<0.000000e+00> : vector<8x128xf32>
    %89 = tpu.matmul %86, %8, %cst_31 {dimension_numbers = #tpu.dot_dimension_numbers<[1], [0], [0], [1], [0, 0, 1, 1], [], []>} : vector<8x32xf32>, vector<32x128xf32>, vector<8x128xf32> -> vector<8x128xf32>
    %90 = arith.addf %88, %89 : vector<8x128xf32>
    %91 = arith.negf %90 : vector<8x128xf32>
    %92 = math.exp %91 : vector<8x128xf32>
    %cst_32 = arith.constant 1.000000e+00 : f32
    %93 = vector.broadcast %cst_32 : f32 to vector<8x128xf32>
    %94 = arith.addf %93, %92 : vector<8x128xf32>
    %95 = arith.divf %93, %94 : vector<8x128xf32>
    %96 = vector.extract_strided_slice %95 {offsets = [0, 0], sizes = [8, 32], strides = [1, 1]} : vector<8x128xf32> to vector<8x32xf32>
    %97 = vector.extract_strided_slice %95 {offsets = [0, 32], sizes = [8, 32], strides = [1, 1]} : vector<8x128xf32> to vector<8x32xf32>
    %98 = vector.extract_strided_slice %95 {offsets = [0, 96], sizes = [8, 32], strides = [1, 1]} : vector<8x128xf32> to vector<8x32xf32>
    %99 = vector.extract_strided_slice %90 {offsets = [0, 64], sizes = [8, 32], strides = [1, 1]} : vector<8x128xf32> to vector<8x32xf32>
    %100 = math.tanh %99 : vector<8x32xf32>
    %101 = arith.mulf %97, %84 : vector<8x32xf32>
    %102 = arith.mulf %96, %100 : vector<8x32xf32>
    %103 = arith.addf %101, %102 : vector<8x32xf32>
    %104 = math.tanh %103 : vector<8x32xf32>
    %105 = arith.mulf %98, %104 : vector<8x32xf32>
    %c5 = arith.constant 5 : index
    %c0_33 = arith.constant 0 : index
    %c0_34 = arith.constant 0 : index
    %106 = vector.load %arg7[%c5, %c0_33, %c0_34] : memref<8x8x128xf32, #tpu.memory_space<vmem>>, vector<1x8x128xf32>
    %107 = vector.shape_cast %106 : vector<1x8x128xf32> to vector<8x128xf32>
    %cst_35 = arith.constant dense<0.000000e+00> : vector<8x128xf32>
    %108 = tpu.matmul %105, %8, %cst_35 {dimension_numbers = #tpu.dot_dimension_numbers<[1], [0], [0], [1], [0, 0, 1, 1], [], []>} : vector<8x32xf32>, vector<32x128xf32>, vector<8x128xf32> -> vector<8x128xf32>
    %109 = arith.addf %107, %108 : vector<8x128xf32>
    %110 = arith.negf %109 : vector<8x128xf32>
    %111 = math.exp %110 : vector<8x128xf32>
    %cst_36 = arith.constant 1.000000e+00 : f32
    %112 = vector.broadcast %cst_36 : f32 to vector<8x128xf32>
    %113 = arith.addf %112, %111 : vector<8x128xf32>
    %114 = arith.divf %112, %113 : vector<8x128xf32>
    %115 = vector.extract_strided_slice %114 {offsets = [0, 0], sizes = [8, 32], strides = [1, 1]} : vector<8x128xf32> to vector<8x32xf32>
    %116 = vector.extract_strided_slice %114 {offsets = [0, 32], sizes = [8, 32], strides = [1, 1]} : vector<8x128xf32> to vector<8x32xf32>
    %117 = vector.extract_strided_slice %114 {offsets = [0, 96], sizes = [8, 32], strides = [1, 1]} : vector<8x128xf32> to vector<8x32xf32>
    %118 = vector.extract_strided_slice %109 {offsets = [0, 64], sizes = [8, 32], strides = [1, 1]} : vector<8x128xf32> to vector<8x32xf32>
    %119 = math.tanh %118 : vector<8x32xf32>
    %120 = arith.mulf %116, %103 : vector<8x32xf32>
    %121 = arith.mulf %115, %119 : vector<8x32xf32>
    %122 = arith.addf %120, %121 : vector<8x32xf32>
    %123 = math.tanh %122 : vector<8x32xf32>
    %124 = arith.mulf %117, %123 : vector<8x32xf32>
    %c6 = arith.constant 6 : index
    %c0_37 = arith.constant 0 : index
    %c0_38 = arith.constant 0 : index
    %125 = vector.load %arg7[%c6, %c0_37, %c0_38] : memref<8x8x128xf32, #tpu.memory_space<vmem>>, vector<1x8x128xf32>
    %126 = vector.shape_cast %125 : vector<1x8x128xf32> to vector<8x128xf32>
    %cst_39 = arith.constant dense<0.000000e+00> : vector<8x128xf32>
    %127 = tpu.matmul %124, %8, %cst_39 {dimension_numbers = #tpu.dot_dimension_numbers<[1], [0], [0], [1], [0, 0, 1, 1], [], []>} : vector<8x32xf32>, vector<32x128xf32>, vector<8x128xf32> -> vector<8x128xf32>
    %128 = arith.addf %126, %127 : vector<8x128xf32>
    %129 = arith.negf %128 : vector<8x128xf32>
    %130 = math.exp %129 : vector<8x128xf32>
    %cst_40 = arith.constant 1.000000e+00 : f32
    %131 = vector.broadcast %cst_40 : f32 to vector<8x128xf32>
    %132 = arith.addf %131, %130 : vector<8x128xf32>
    %133 = arith.divf %131, %132 : vector<8x128xf32>
    %134 = vector.extract_strided_slice %133 {offsets = [0, 0], sizes = [8, 32], strides = [1, 1]} : vector<8x128xf32> to vector<8x32xf32>
    %135 = vector.extract_strided_slice %133 {offsets = [0, 32], sizes = [8, 32], strides = [1, 1]} : vector<8x128xf32> to vector<8x32xf32>
    %136 = vector.extract_strided_slice %133 {offsets = [0, 96], sizes = [8, 32], strides = [1, 1]} : vector<8x128xf32> to vector<8x32xf32>
    %137 = vector.extract_strided_slice %128 {offsets = [0, 64], sizes = [8, 32], strides = [1, 1]} : vector<8x128xf32> to vector<8x32xf32>
    %138 = math.tanh %137 : vector<8x32xf32>
    %139 = arith.mulf %135, %122 : vector<8x32xf32>
    %140 = arith.mulf %134, %138 : vector<8x32xf32>
    %141 = arith.addf %139, %140 : vector<8x32xf32>
    %142 = math.tanh %141 : vector<8x32xf32>
    %143 = arith.mulf %136, %142 : vector<8x32xf32>
    %c7 = arith.constant 7 : index
    %c0_41 = arith.constant 0 : index
    %c0_42 = arith.constant 0 : index
    %144 = vector.load %arg7[%c7, %c0_41, %c0_42] : memref<8x8x128xf32, #tpu.memory_space<vmem>>, vector<1x8x128xf32>
    %145 = vector.shape_cast %144 : vector<1x8x128xf32> to vector<8x128xf32>
    %cst_43 = arith.constant dense<0.000000e+00> : vector<8x128xf32>
    %146 = tpu.matmul %143, %8, %cst_43 {dimension_numbers = #tpu.dot_dimension_numbers<[1], [0], [0], [1], [0, 0, 1, 1], [], []>} : vector<8x32xf32>, vector<32x128xf32>, vector<8x128xf32> -> vector<8x128xf32>
    %147 = arith.addf %145, %146 : vector<8x128xf32>
    %148 = arith.negf %147 : vector<8x128xf32>
    %149 = math.exp %148 : vector<8x128xf32>
    %cst_44 = arith.constant 1.000000e+00 : f32
    %150 = vector.broadcast %cst_44 : f32 to vector<8x128xf32>
    %151 = arith.addf %150, %149 : vector<8x128xf32>
    %152 = arith.divf %150, %151 : vector<8x128xf32>
    %153 = vector.extract_strided_slice %152 {offsets = [0, 0], sizes = [8, 32], strides = [1, 1]} : vector<8x128xf32> to vector<8x32xf32>
    %154 = vector.extract_strided_slice %152 {offsets = [0, 32], sizes = [8, 32], strides = [1, 1]} : vector<8x128xf32> to vector<8x32xf32>
    %155 = vector.extract_strided_slice %152 {offsets = [0, 96], sizes = [8, 32], strides = [1, 1]} : vector<8x128xf32> to vector<8x32xf32>
    %156 = vector.extract_strided_slice %147 {offsets = [0, 64], sizes = [8, 32], strides = [1, 1]} : vector<8x128xf32> to vector<8x32xf32>
    %157 = math.tanh %156 : vector<8x32xf32>
    %158 = arith.mulf %154, %141 : vector<8x32xf32>
    %159 = arith.mulf %153, %157 : vector<8x32xf32>
    %160 = arith.addf %158, %159 : vector<8x32xf32>
    %161 = math.tanh %160 : vector<8x32xf32>
    %162 = arith.mulf %155, %161 : vector<8x32xf32>
    %c0_45 = arith.constant 0 : index
    %c0_46 = arith.constant 0 : index
    %163 = vector.load %arg4[%c0_45, %c0_46] : memref<32x128xf32, #tpu.memory_space<vmem>>, vector<32x128xf32>
    %cst_47 = arith.constant dense<0.000000e+00> : vector<8x128xf32>
    %164 = tpu.matmul %162, %163, %cst_47 {dimension_numbers = #tpu.dot_dimension_numbers<[1], [0], [0], [1], [0, 0, 1, 1], [], []>} : vector<8x32xf32>, vector<32x128xf32>, vector<8x128xf32> -> vector<8x128xf32>
    %c0_48 = arith.constant 0 : index
    %c0_49 = arith.constant 0 : index
    %165 = vector.load %arg5[%c0_48, %c0_49] : memref<1x128xf32, #tpu.memory_space<vmem>>, vector<1x128xf32>
    %166 = vector.broadcast %165 : vector<1x128xf32> to vector<8x128xf32>
    %167 = arith.addf %164, %166 : vector<8x128xf32>
    %c0_50 = arith.constant 0 : index
    %c0_51 = arith.constant 0 : index
    %168 = vector.load %arg6[%c0_50, %c0_51] : memref<8x128xf32, #tpu.memory_space<vmem>>, vector<8x128xf32>
    tpu.vector_store %arg6[%c0_50, %c0_51], %167 {strides = array<i32>} : memref<8x128xf32, #tpu.memory_space<vmem>>, vector<8x128xf32>,
    return
  }
}

</mosaic_0001>

<llo_original>
// kernel: mylstm_forward.1
$region0: #{mylstm_forward.1}
  #allocation0 [shape = 'u32[]', space=smem, size = 0x4, offset = 0x4, fixed_abs, tag = 'smem constant byte address 0x4 - core index']
  #allocation1 [shape = 'u32[144,128]{1,0:T(1,128)}', space=vmem, size = 0x12000, scoped, tag = 'internal scratch']
  #allocation2 [shape = 'f32[8,8,128]{2,1,0:T(8,128)}', space=vmem, size = 0x8000, scoped, tag = 'scratch operand']
  %s0 = inlined_call_operand.vmem [shape: f32[64,32], index: 0, kind: input, shape index: {}]
  %s1 = inlined_call_operand.vmem [shape: f32[32,128], index: 1, kind: input, shape index: {}]
  %s2 = inlined_call_operand.vmem [shape: f32[32,128], index: 2, kind: input, shape index: {}]
  %s3 = inlined_call_operand.vmem [shape: f32[1,128], index: 3, kind: input, shape index: {}]
  %s4 = inlined_call_operand.vmem [shape: f32[32,128], index: 4, kind: input, shape index: {}]
  %s5 = inlined_call_operand.vmem [shape: f32[1,128], index: 5, kind: input, shape index: {}]
  %s6 = inlined_call_operand.vmem [shape: f32[8,128], index: 6, kind: output, shape index: {}]
  %s7 = sld [smem:[#allocation0]]
  $region34: #{mylstm_forward.1} parent=0
    _
  %s9 = ssub.s32 1, %s7
  %s10 = scalar_select 0, %s9, %s7
  // Predicated region
  $region2: #{mylstm_forward.1} parent=0 // pred_check
    _
  $region3: #{mylstm_forward.1} parent=0 // pred_check_branch
    %12 = sbr.rel (0) target = $region5
  $region4: #{mylstm_forward.1} parent=0 // pred_region
    _
  $region5: #{mylstm_forward.1} parent=0 // pred_fallthru
    _
  // Predicated region
  $region6: #{mylstm_forward.1} parent=0 // pred_check
    _
  $region7: #{mylstm_forward.1} parent=0 // pred_check_branch
    %14 = sbr.rel (0) target = $region9
  $region8: #{mylstm_forward.1} parent=0 // pred_region
    _
  $region9: #{mylstm_forward.1} parent=0 // pred_fallthru
    _
  // Predicated region
  $region10: #{mylstm_forward.1} parent=0 // pred_check
    _
  $region11: #{mylstm_forward.1} parent=0 // pred_check_branch
    %16 = sbr.rel (0) target = $region13
  $region12: #{mylstm_forward.1} parent=0 // pred_region
    _
  $region13: #{mylstm_forward.1} parent=0 // pred_fallthru
    _
  // Predicated region
  $region14: #{mylstm_forward.1} parent=0 // pred_check
    _
  $region15: #{mylstm_forward.1} parent=0 // pred_check_branch
    %18 = sbr.rel (0) target = $region17
  $region16: #{mylstm_forward.1} parent=0 // pred_region
    _
  $region17: #{mylstm_forward.1} parent=0 // pred_fallthru
    _
  // Predicated region
  $region18: #{mylstm_forward.1} parent=0 // pred_check
    _
  $region19: #{mylstm_forward.1} parent=0 // pred_check_branch
    %20 = sbr.rel (0) target = $region21
  $region20: #{mylstm_forward.1} parent=0 // pred_region
    _
  $region21: #{mylstm_forward.1} parent=0 // pred_fallthru
    _
  // Predicated region
  $region22: #{mylstm_forward.1} parent=0 // pred_check
    _
  $region23: #{mylstm_forward.1} parent=0 // pred_check_branch
    %22 = sbr.rel (0) target = $region25
  $region24: #{mylstm_forward.1} parent=0 // pred_region
    _
  $region25: #{mylstm_forward.1} parent=0 // pred_fallthru
    _
  %v23 = vld [vmem:[%s0] sm:$0xff]
  %v24 = vld [vmem:[%s0 + $0x8] sm:$0xff]
  %v25 = vld [vmem:[%s0 + $0x10] sm:$0xff]
  %v26 = vld [vmem:[%s0 + $0x18] sm:$0xff]
  %v27 = vld [vmem:[%s0 + $0x20] sm:$0xff]
  %v28 = vld [vmem:[%s0 + $0x28] sm:$0xff]
  %v29 = vld [vmem:[%s0 + $0x30] sm:$0xff]
  %v30 = vld [vmem:[%s0 + $0x38] sm:$0xff]
  %v31 = vld [vmem:[%s1] sm:$0xff]
  %v32 = vld [vmem:[%s1 + $0x8] sm:$0xff]
  %v33 = vld [vmem:[%s1 + $0x10] sm:$0xff]
  %v34 = vld [vmem:[%s1 + $0x18] sm:$0xff]
  %v35 = vld [vmem:[%s3] sm:$0x1]
  %v37 = vlaneseq
  %v38 = vshrl.u32 %v37, 7
  %v39 = vsub.s32 0, %v38
  %v40 = vrot.slane %v35, %v39
  %vm42 = vcmask 261120
  %v44 = vsel %vm42, %v23, 0
  %v47 = vsel %vm42, %v24, 0
  %v50 = vsel %vm42, %v25, 0
  %v53 = vsel %vm42, %v26, 0
  %v56 = vsel %vm42, %v27, 0
  %v59 = vsel %vm42, %v28, 0
  %v62 = vsel %vm42, %v29, 0
  %v65 = vsel %vm42, %v30, 0
  %67 = vmatprep.subr.mxu0 0.0
  %68 = vmatpush1.msra.mxu0 %v31
  %69 = vmatprep.subr.mxu0 0.0
  %70 = vmatpush1.msra.mxu0 %v32
  %71 = vmatprep.subr.mxu0 0.0
  %72 = vmatpush1.msra.mxu0 %v33
  %73 = vmatprep.subr.mxu0 0.0
  %74 = vmatpush1.msra.mxu0 %v34
  %75 = vmatprep.subr.mxu0 0.0
  %76 = vmatpush1.msra.mxu0 0.0
  %77 = vmatprep.subr.mxu0 0.0
  %78 = vmatpush1.msra.mxu0 0.0
  %79 = vmatprep.subr.mxu0 0.0
  %80 = vmatpush1.msra.mxu0 0.0
  %81 = vmatprep.subr.mxu0 0.0
  %82 = vmatpush1.msra.mxu0 0.0
  %83 = vmatprep.subr.mxu0 0.0
  %84 = vmatpush1.msra.mxu0 0.0
  %85 = vmatprep.subr.mxu0 0.0
  %86 = vmatpush1.msra.mxu0 0.0
  %87 = vmatprep.subr.mxu0 0.0
  %88 = vmatpush1.msra.mxu0 0.0
  %89 = vmatprep.subr.mxu0 0.0
  %90 = vmatpush1.msra.mxu0 0.0
  %91 = vmatprep.subr.mxu0 0.0
  %92 = vmatpush1.msra.mxu0 0.0
  %93 = vmatprep.subr.mxu0 0.0
  %94 = vmatpush1.msra.mxu0 0.0
  %95 = vmatprep.subr.mxu0 0.0
  %96 = vmatpush1.msra.mxu0 0.0
  %97 = vmatprep.subr.mxu0 0.0
  %98 = vmatpush1.msra.mxu0 0.0
  %99 = vmatprep.subr.mxu0 0.0
  %100 = vmatpush1.msra.mxu0 0.0
  %101 = vmatprep.subr.mxu0 0.0
  %102 = vmatpush1.msra.mxu0 0.0
  %103 = vmatprep.subr.mxu0 0.0
  %104 = vmatpush1.msra.mxu0 0.0
  %105 = vmatprep.subr.mxu0 0.0
  %106 = vmatpush1.msra.mxu0 0.0
  %107 = vmatprep.subr.mxu0 0.0
  %108 = vmatpush1.msra.mxu0 0.0
  %109 = vmatprep.subr.mxu0 0.0
  %110 = vmatpush1.msra.mxu0 0.0
  %111 = vmatprep.subr.mxu0 0.0
  %112 = vmatpush1.msra.mxu0 0.0
  %113 = vmatprep.subr.mxu0 0.0
  %114 = vmatpush1.msra.mxu0 0.0
  %115 = vmatprep.subr.mxu0 0.0
  %116 = vmatpush1.msra.mxu0 0.0
  %117 = vmatprep.subr.mxu0 0.0
  %118 = vmatpush1.msra.mxu0 0.0
  %119 = vmatprep.subr.mxu0 0.0
  %120 = vmatpush1.msra.mxu0 0.0
  %121 = vmatprep.subr.mxu0 0.0
  %122 = vmatpush1.msra.mxu0 0.0
  %123 = vmatprep.subr.mxu0 0.0
  %124 = vmatpush1.msra.mxu0 0.0
  %125 = vmatprep.subr.mxu0 0.0
  %126 = vmatpush1.msra.mxu0 0.0
  %127 = vmatprep.subr.mxu0 0.0
  %128 = vmatpush1.msra.mxu0 0.0
  %129 = vmatprep.subr.mxu0 0.0
  %130 = vmatpush1.msra.mxu0 0.0
  %131 = vmatprep.mubr.f32.mxu0 0.0
  %132 = vmatmul.mubr.f32.gmra.mrb[0].mxu0 %v44
  %v133 = vpop.f32.mrb[0].mxu0
  %v134 = vadd.f32 %v40, %v133
  %v135 = vpop.f32.mrb[0].mxu0
  %136 = vmatprep.mubr.f32.mxu0 0.0
  %137 = vmatmul.mubr.f32.gmra.mrb[0].mxu0 %v47
  %v138 = vpop.f32.mrb[0].mxu0
  %v139 = vadd.f32 %v40, %v138
  %v140 = vpop.f32.mrb[0].mxu0
  %141 = vmatprep.mubr.f32.mxu0 0.0
  %142 = vmatmul.mubr.f32.gmra.mrb[0].mxu0 %v50
  %v143 = vpop.f32.mrb[0].mxu0
  %v144 = vadd.f32 %v40, %v143
  %v145 = vpop.f32.mrb[0].mxu0
  %146 = vmatprep.mubr.f32.mxu0 0.0
  %147 = vmatmul.mubr.f32.gmra.mrb[0].mxu0 %v53
  %v148 = vpop.f32.mrb[0].mxu0
  %v149 = vadd.f32 %v40, %v148
  %v150 = vpop.f32.mrb[0].mxu0
  %151 = vmatprep.mubr.f32.mxu0 0.0
  %152 = vmatmul.mubr.f32.gmra.mrb[0].mxu0 %v56
  %v153 = vpop.f32.mrb[0].mxu0
  %v154 = vadd.f32 %v40, %v153
  %v155 = vpop.f32.mrb[0].mxu0
  %156 = vmatprep.mubr.f32.mxu0 0.0
  %157 = vmatmul.mubr.f32.gmra.mrb[0].mxu0 %v59
  %v158 = vpop.f32.mrb[0].mxu0
  %v159 = vadd.f32 %v40, %v158
  %v160 = vpop.f32.mrb[0].mxu0
  %161 = vmatprep.mubr.f32.mxu0 0.0
  %162 = vmatmul.mubr.f32.gmra.mrb[0].mxu0 %v62
  %v163 = vpop.f32.mrb[0].mxu0
  %v164 = vadd.f32 %v40, %v163
  %v165 = vpop.f32.mrb[0].mxu0
  %166 = vmatprep.mubr.f32.mxu0 0.0
  %167 = vmatmul.mubr.f32.gmra.mrb[0].mxu0 %v65
  %v168 = vpop.f32.mrb[0].mxu0
  %v169 = vadd.f32 %v40, %v168
  %v170 = vpop.f32.mrb[0].mxu0
  %171 = vdwg.mxu0
  %172 = vst [vmem:[#allocation2] sm:$0xff] %v134
  %173 = vst [vmem:[#allocation2 + $0x8] sm:$0xff] %v139
  %174 = vst [vmem:[#allocation2 + $0x10] sm:$0xff] %v144
  %175 = vst [vmem:[#allocation2 + $0x18] sm:$0xff] %v149
  %176 = vst [vmem:[#allocation2 + $0x20] sm:$0xff] %v154
  %177 = vst [vmem:[#allocation2 + $0x28] sm:$0xff] %v159
  %178 = vst [vmem:[#allocation2 + $0x30] sm:$0xff] %v164
  %179 = vst [vmem:[#allocation2 + $0x38] sm:$0xff] %v169
  %v180 = vld [vmem:[%s2] sm:$0xff]
  %v181 = vld [vmem:[%s2 + $0x8] sm:$0xff]
  %v182 = vld [vmem:[%s2 + $0x10] sm:$0xff]
  %v183 = vld [vmem:[%s2 + $0x18] sm:$0xff]
  %v184 = vld [vmem:[#allocation2] sm:$0xff]
  %v186 = vsel %vm42, 0.0, 0
  %188 = vmatprep.subr.mxu0 0.0
  %189 = vmatpush1.msra.mxu0 %v180
  %190 = vmatprep.subr.mxu0 0.0
  %191 = vmatpush1.msra.mxu0 %v181
  %192 = vmatprep.subr.mxu0 0.0
  %193 = vmatpush1.msra.mxu0 %v182
  %194 = vmatprep.subr.mxu0 0.0
  %195 = vmatpush1.msra.mxu0 %v183
  %196 = vmatprep.subr.mxu0 0.0
  %197 = vmatpush1.msra.mxu0 0.0
  %198 = vmatprep.subr.mxu0 0.0
  %199 = vmatpush1.msra.mxu0 0.0
  %200 = vmatprep.subr.mxu0 0.0
  %201 = vmatpush1.msra.mxu0 0.0
  %202 = vmatprep.subr.mxu0 0.0
  %203 = vmatpush1.msra.mxu0 0.0
  %204 = vmatprep.subr.mxu0 0.0
  %205 = vmatpush1.msra.mxu0 0.0
  %206 = vmatprep.subr.mxu0 0.0
  %207 = vmatpush1.msra.mxu0 0.0
  %208 = vmatprep.subr.mxu0 0.0
  %209 = vmatpush1.msra.mxu0 0.0
  %210 = vmatprep.subr.mxu0 0.0
  %211 = vmatpush1.msra.mxu0 0.0
  %212 = vmatprep.subr.mxu0 0.0
  %213 = vmatpush1.msra.mxu0 0.0
  %214 = vmatprep.subr.mxu0 0.0
  %215 = vmatpush1.msra.mxu0 0.0
  %216 = vmatprep.subr.mxu0 0.0
  %217 = vmatpush1.msra.mxu0 0.0
  %218 = vmatprep.subr.mxu0 0.0
  %219 = vmatpush1.msra.mxu0 0.0
  %220 = vmatprep.subr.mxu0 0.0
  %221 = vmatpush1.msra.mxu0 0.0
  %222 = vmatprep.subr.mxu0 0.0
  %223 = vmatpush1.msra.mxu0 0.0
  %224 = vmatprep.subr.mxu0 0.0
  %225 = vmatpush1.msra.mxu0 0.0
  %226 = vmatprep.subr.mxu0 0.0
  %227 = vmatpush1.msra.mxu0 0.0
  %228 = vmatprep.subr.mxu0 0.0
  %229 = vmatpush1.msra.mxu0 0.0
  %230 = vmatprep.subr.mxu0 0.0
  %231 = vmatpush1.msra.mxu0 0.0
  %232 = vmatprep.subr.mxu0 0.0
  %233 = vmatpush1.msra.mxu0 0.0
  %234 = vmatprep.subr.mxu0 0.0
  %235 = vmatpush1.msra.mxu0 0.0
  %236 = vmatprep.subr.mxu0 0.0
  %237 = vmatpush1.msra.mxu0 0.0
  %238 = vmatprep.subr.mxu0 0.0
  %239 = vmatpush1.msra.mxu0 0.0
  %240 = vmatprep.subr.mxu0 0.0
  %241 = vmatpush1.msra.mxu0 0.0
  %242 = vmatprep.subr.mxu0 0.0
  %243 = vmatpush1.msra.mxu0 0.0
  %244 = vmatprep.subr.mxu0 0.0
  %245 = vmatpush1.msra.mxu0 0.0
  %246 = vmatprep.subr.mxu0 0.0
  %247 = vmatpush1.msra.mxu0 0.0
  %248 = vmatprep.subr.mxu0 0.0
  %249 = vmatpush1.msra.mxu0 0.0
  %250 = vmatprep.subr.mxu0 0.0
  %251 = vmatpush1.msra.mxu0 0.0
  %252 = vmatprep.mubr.f32.mxu0 0.0
  %253 = vmatmul.mubr.f32.gmra.mrb[0].mxu0 %v186
  %v254 = vpop.f32.mrb[0].mxu0
  %v255 = vadd.f32 0.0, %v254
  %v256 = vpop.f32.mrb[0].mxu0
  %257 = vdwg.mxu0
  %v258 = vadd.f32 %v184, %v255
  %v259 = vxor.u32 %v258, 2147483648
  %v260 = vmul.f32 %v259, 1.442695
  %v261 = vpow.pop %v260
  %v262 = vadd.f32 %v261, 1.0
  %v263 = vrcp.pop %v262
  %v264 = vmul.f32 1.0, %v263
  %v265 = vtanh.pop %v258
  %v266 = vmul.f32 %v264, 0.0
  %268 = vrot.lane.b32.xlu0 %v265, 64
  %v269 = vpop.permute.xlu0 %268
  %v271 = vmul.f32 %v264, %v269
  %273 = vrot.lane.b32.xlu0 %v271, 32
  %v274 = vpop.permute.xlu0 %273
  %v276 = vadd.f32 %v266, %v274
  %v277 = vtanh.pop %v276
  %279 = vrot.lane.b32.xlu0 %v277, 64
  %v280 = vpop.permute.xlu0 %279
  %v282 = vmul.f32 %v264, %v280
  %s283 = scalar_lea.vmem [#allocation2], 8
  %v284 = vld [vmem:[%s283] sm:$0xff]
  %286 = vrot.lane.b32.xlu0 %v282, 32
  %v287 = vpop.permute.xlu0 %286
  %v288 = vsel %vm42, %v287, 0
  %290 = vmatprep.subr.mxu0 0.0
  %291 = vmatpush1.msra.mxu0 %v180
  %292 = vmatprep.subr.mxu0 0.0
  %293 = vmatpush1.msra.mxu0 %v181
  %294 = vmatprep.subr.mxu0 0.0
  %295 = vmatpush1.msra.mxu0 %v182
  %296 = vmatprep.subr.mxu0 0.0
  %297 = vmatpush1.msra.mxu0 %v183
  %298 = vmatprep.subr.mxu0 0.0
  %299 = vmatpush1.msra.mxu0 0.0
  %300 = vmatprep.subr.mxu0 0.0
  %301 = vmatpush1.msra.mxu0 0.0
  %302 = vmatprep.subr.mxu0 0.0
  %303 = vmatpush1.msra.mxu0 0.0
  %304 = vmatprep.subr.mxu0 0.0
  %305 = vmatpush1.msra.mxu0 0.0
  %306 = vmatprep.subr.mxu0 0.0
  %307 = vmatpush1.msra.mxu0 0.0
  %308 = vmatprep.subr.mxu0 0.0
  %309 = vmatpush1.msra.mxu0 0.0
  %310 = vmatprep.subr.mxu0 0.0
  %311 = vmatpush1.msra.mxu0 0.0
  %312 = vmatprep.subr.mxu0 0.0
  %313 = vmatpush1.msra.mxu0 0.0
  %314 = vmatprep.subr.mxu0 0.0
  %315 = vmatpush1.msra.mxu0 0.0
  %316 = vmatprep.subr.mxu0 0.0
  %317 = vmatpush1.msra.mxu0 0.0
  %318 = vmatprep.subr.mxu0 0.0
  %319 = vmatpush1.msra.mxu0 0.0
  %320 = vmatprep.subr.mxu0 0.0
  %321 = vmatpush1.msra.mxu0 0.0
  %322 = vmatprep.subr.mxu0 0.0
  %323 = vmatpush1.msra.mxu0 0.0
  %324 = vmatprep.subr.mxu0 0.0
  %325 = vmatpush1.msra.mxu0 0.0
  %326 = vmatprep.subr.mxu0 0.0
  %327 = vmatpush1.msra.mxu0 0.0
  %328 = vmatprep.subr.mxu0 0.0
  %329 = vmatpush1.msra.mxu0 0.0
  %330 = vmatprep.subr.mxu0 0.0
  %331 = vmatpush1.msra.mxu0 0.0
  %332 = vmatprep.subr.mxu0 0.0
  %333 = vmatpush1.msra.mxu0 0.0
  %334 = vmatprep.subr.mxu0 0.0
  %335 = vmatpush1.msra.mxu0 0.0
  %336 = vmatprep.subr.mxu0 0.0
  %337 = vmatpush1.msra.mxu0 0.0
  %338 = vmatprep.subr.mxu0 0.0
  %339 = vmatpush1.msra.mxu0 0.0
  %340 = vmatprep.subr.mxu0 0.0
  %341 = vmatpush1.msra.mxu0 0.0
  %342 = vmatprep.subr.mxu0 0.0
  %343 = vmatpush1.msra.mxu0 0.0
  %344 = vmatprep.subr.mxu0 0.0
  %345 = vmatpush1.msra.mxu0 0.0
  %346 = vmatprep.subr.mxu0 0.0
  %347 = vmatpush1.msra.mxu0 0.0
  %348 = vmatprep.subr.mxu0 0.0
  %349 = vmatpush1.msra.mxu0 0.0
  %350 = vmatprep.subr.mxu0 0.0
  %351 = vmatpush1.msra.mxu0 0.0
  %352 = vmatprep.subr.mxu0 0.0
  %353 = vmatpush1.msra.mxu0 0.0
  %354 = vmatprep.mubr.f32.mxu0 0.0
  %355 = vmatmul.mubr.f32.gmra.mrb[0].mxu0 %v288
  %v356 = vpop.f32.mrb[0].mxu0
  %v357 = vadd.f32 0.0, %v356
  %v358 = vpop.f32.mrb[0].mxu0
  %359 = vdwg.mxu0
  %v360 = vadd.f32 %v284, %v357
  %v361 = vxor.u32 %v360, 2147483648
  %v362 = vmul.f32 %v361, 1.442695
  %v363 = vpow.pop %v362
  %v364 = vadd.f32 %v363, 1.0
  %v365 = vrcp.pop %v364
  %v366 = vmul.f32 1.0, %v365
  %v367 = vtanh.pop %v360
  %v368 = vmul.f32 %v366, %v276
  %370 = vrot.lane.b32.xlu0 %v367, 64
  %v371 = vpop.permute.xlu0 %370
  %v373 = vmul.f32 %v366, %v371
  %375 = vrot.lane.b32.xlu0 %v373, 32
  %v376 = vpop.permute.xlu0 %375
  %v378 = vadd.f32 %v368, %v376
  %v379 = vtanh.pop %v378
  %381 = vrot.lane.b32.xlu0 %v379, 64
  %v382 = vpop.permute.xlu0 %381
  %v384 = vmul.f32 %v366, %v382
  %s385 = scalar_lea.vmem [#allocation2], 16
  %v386 = vld [vmem:[%s385] sm:$0xff]
  %388 = vrot.lane.b32.xlu0 %v384, 32
  %v389 = vpop.permute.xlu0 %388
  %v390 = vsel %vm42, %v389, 0
  %392 = vmatprep.subr.mxu0 0.0
  %393 = vmatpush1.msra.mxu0 %v180
  %394 = vmatprep.subr.mxu0 0.0
  %395 = vmatpush1.msra.mxu0 %v181
  %396 = vmatprep.subr.mxu0 0.0
  %397 = vmatpush1.msra.mxu0 %v182
  %398 = vmatprep.subr.mxu0 0.0
  %399 = vmatpush1.msra.mxu0 %v183
  %400 = vmatprep.subr.mxu0 0.0
  %401 = vmatpush1.msra.mxu0 0.0
  %402 = vmatprep.subr.mxu0 0.0
  %403 = vmatpush1.msra.mxu0 0.0
  %404 = vmatprep.subr.mxu0 0.0
  %405 = vmatpush1.msra.mxu0 0.0
  %406 = vmatprep.subr.mxu0 0.0
  %407 = vmatpush1.msra.mxu0 0.0
  %408 = vmatprep.subr.mxu0 0.0
  %409 = vmatpush1.msra.mxu0 0.0
  %410 = vmatprep.subr.mxu0 0.0
  %411 = vmatpush1.msra.mxu0 0.0
  %412 = vmatprep.subr.mxu0 0.0
  %413 = vmatpush1.msra.mxu0 0.0
  %414 = vmatprep.subr.mxu0 0.0
  %415 = vmatpush1.msra.mxu0 0.0
  %416 = vmatprep.subr.mxu0 0.0
  %417 = vmatpush1.msra.mxu0 0.0
  %418 = vmatprep.subr.mxu0 0.0
  %419 = vmatpush1.msra.mxu0 0.0
  %420 = vmatprep.subr.mxu0 0.0
  %421 = vmatpush1.msra.mxu0 0.0
  %422 = vmatprep.subr.mxu0 0.0
  %423 = vmatpush1.msra.mxu0 0.0
  %424 = vmatprep.subr.mxu0 0.0
  %425 = vmatpush1.msra.mxu0 0.0
  %426 = vmatprep.subr.mxu0 0.0
  %427 = vmatpush1.msra.mxu0 0.0
  %428 = vmatprep.subr.mxu0 0.0
  %429 = vmatpush1.msra.mxu0 0.0
  %430 = vmatprep.subr.mxu0 0.0
  %431 = vmatpush1.msra.mxu0 0.0
  %432 = vmatprep.subr.mxu0 0.0
  %433 = vmatpush1.msra.mxu0 0.0
  %434 = vmatprep.subr.mxu0 0.0
  %435 = vmatpush1.msra.mxu0 0.0
  %436 = vmatprep.subr.mxu0 0.0
  %437 = vmatpush1.msra.mxu0 0.0
  %438 = vmatprep.subr.mxu0 0.0
  %439 = vmatpush1.msra.mxu0 0.0
  %440 = vmatprep.subr.mxu0 0.0
  %441 = vmatpush1.msra.mxu0 0.0
  %442 = vmatprep.subr.mxu0 0.0
  %443 = vmatpush1.msra.mxu0 0.0
  %444 = vmatprep.subr.mxu0 0.0
  %445 = vmatpush1.msra.mxu0 0.0
  %446 = vmatprep.subr.mxu0 0.0
  %447 = vmatpush1.msra.mxu0 0.0
  %448 = vmatprep.subr.mxu0 0.0
  %449 = vmatpush1.msra.mxu0 0.0
  %450 = vmatprep.subr.mxu0 0.0
  %451 = vmatpush1.msra.mxu0 0.0
  %452 = vmatprep.subr.mxu0 0.0
  %453 = vmatpush1.msra.mxu0 0.0
  %454 = vmatprep.subr.mxu0 0.0
  %455 = vmatpush1.msra.mxu0 0.0
  %456 = vmatprep.mubr.f32.mxu0 0.0
  %457 = vmatmul.mubr.f32.gmra.mrb[0].mxu0 %v390
  %v458 = vpop.f32.mrb[0].mxu0
  %v459 = vadd.f32 0.0, %v458
  %v460 = vpop.f32.mrb[0].mxu0
  %461 = vdwg.mxu0
  %v462 = vadd.f32 %v386, %v459
  %v463 = vxor.u32 %v462, 2147483648
  %v464 = vmul.f32 %v463, 1.442695
  %v465 = vpow.pop %v464
  %v466 = vadd.f32 %v465, 1.0
  %v467 = vrcp.pop %v466
  %v468 = vmul.f32 1.0, %v467
  %v469 = vtanh.pop %v462
  %v470 = vmul.f32 %v468, %v378
  %472 = vrot.lane.b32.xlu0 %v469, 64
  %v473 = vpop.permute.xlu0 %472
  %v475 = vmul.f32 %v468, %v473
  %477 = vrot.lane.b32.xlu0 %v475, 32
  %v478 = vpop.permute.xlu0 %477
  %v480 = vadd.f32 %v470, %v478
  %v481 = vtanh.pop %v480
  %483 = vrot.lane.b32.xlu0 %v481, 64
  %v484 = vpop.permute.xlu0 %483
  %v486 = vmul.f32 %v468, %v484
  %s487 = scalar_lea.vmem [#allocation2], 24
  %v488 = vld [vmem:[%s487] sm:$0xff]
  %490 = vrot.lane.b32.xlu0 %v486, 32
  %v491 = vpop.permute.xlu0 %490
  %v492 = vsel %vm42, %v491, 0
  %494 = vmatprep.subr.mxu0 0.0
  %495 = vmatpush1.msra.mxu0 %v180
  %496 = vmatprep.subr.mxu0 0.0
  %497 = vmatpush1.msra.mxu0 %v181
  %498 = vmatprep.subr.mxu0 0.0
  %499 = vmatpush1.msra.mxu0 %v182
  %500 = vmatprep.subr.mxu0 0.0
  %501 = vmatpush1.msra.mxu0 %v183
  %502 = vmatprep.subr.mxu0 0.0
  %503 = vmatpush1.msra.mxu0 0.0
  %504 = vmatprep.subr.mxu0 0.0
  %505 = vmatpush1.msra.mxu0 0.0
  %506 = vmatprep.subr.mxu0 0.0
  %507 = vmatpush1.msra.mxu0 0.0
  %508 = vmatprep.subr.mxu0 0.0
  %509 = vmatpush1.msra.mxu0 0.0
  %510 = vmatprep.subr.mxu0 0.0
  %511 = vmatpush1.msra.mxu0 0.0
  %512 = vmatprep.subr.mxu0 0.0
  %513 = vmatpush1.msra.mxu0 0.0
  %514 = vmatprep.subr.mxu0 0.0
  %515 = vmatpush1.msra.mxu0 0.0
  %516 = vmatprep.subr.mxu0 0.0
  %517 = vmatpush1.msra.mxu0 0.0
  %518 = vmatprep.subr.mxu0 0.0
  %519 = vmatpush1.msra.mxu0 0.0
  %520 = vmatprep.subr.mxu0 0.0
  %521 = vmatpush1.msra.mxu0 0.0
  %522 = vmatprep.subr.mxu0 0.0
  %523 = vmatpush1.msra.mxu0 0.0
  %524 = vmatprep.subr.mxu0 0.0
  %525 = vmatpush1.msra.mxu0 0.0
  %526 = vmatprep.subr.mxu0 0.0
  %527 = vmatpush1.msra.mxu0 0.0
  %528 = vmatprep.subr.mxu0 0.0
  %529 = vmatpush1.msra.mxu0 0.0
  %530 = vmatprep.subr.mxu0 0.0
  %531 = vmatpush1.msra.mxu0 0.0
  %532 = vmatprep.subr.mxu0 0.0
  %533 = vmatpush1.msra.mxu0 0.0
  %534 = vmatprep.subr.mxu0 0.0
  %535 = vmatpush1.msra.mxu0 0.0
  %536 = vmatprep.subr.mxu0 0.0
  %537 = vmatpush1.msra.mxu0 0.0
  %538 = vmatprep.subr.mxu0 0.0
  %539 = vmatpush1.msra.mxu0 0.0
  %540 = vmatprep.subr.mxu0 0.0
  %541 = vmatpush1.msra.mxu0 0.0
  %542 = vmatprep.subr.mxu0 0.0
  %543 = vmatpush1.msra.mxu0 0.0
  %544 = vmatprep.subr.mxu0 0.0
  %545 = vmatpush1.msra.mxu0 0.0
  %546 = vmatprep.subr.mxu0 0.0
  %547 = vmatpush1.msra.mxu0 0.0
  %548 = vmatprep.subr.mxu0 0.0
  %549 = vmatpush1.msra.mxu0 0.0
  %550 = vmatprep.subr.mxu0 0.0
  %551 = vmatpush1.msra.mxu0 0.0
  %552 = vmatprep.subr.mxu0 0.0
  %553 = vmatpush1.msra.mxu0 0.0
  %554 = vmatprep.subr.mxu0 0.0
  %555 = vmatpush1.msra.mxu0 0.0
  %556 = vmatprep.subr.mxu0 0.0
  %557 = vmatpush1.msra.mxu0 0.0
  %558 = vmatprep.mubr.f32.mxu0 0.0
  %559 = vmatmul.mubr.f32.gmra.mrb[0].mxu0 %v492
  %v560 = vpop.f32.mrb[0].mxu0
  %v561 = vadd.f32 0.0, %v560
  %v562 = vpop.f32.mrb[0].mxu0
  %563 = vdwg.mxu0
  %v564 = vadd.f32 %v488, %v561
  %v565 = vxor.u32 %v564, 2147483648
  %v566 = vmul.f32 %v565, 1.442695
  %v567 = vpow.pop %v566
  %v568 = vadd.f32 %v567, 1.0
  %v569 = vrcp.pop %v568
  %v570 = vmul.f32 1.0, %v569
  %v571 = vtanh.pop %v564
  %v572 = vmul.f32 %v570, %v480
  %574 = vrot.lane.b32.xlu0 %v571, 64
  %v575 = vpop.permute.xlu0 %574
  %v577 = vmul.f32 %v570, %v575
  %579 = vrot.lane.b32.xlu0 %v577, 32
  %v580 = vpop.permute.xlu0 %579
  %v582 = vadd.f32 %v572, %v580
  %v583 = vtanh.pop %v582
  %585 = vrot.lane.b32.xlu0 %v583, 64
  %v586 = vpop.permute.xlu0 %585
  %v588 = vmul.f32 %v570, %v586
  %s589 = scalar_lea.vmem [#allocation2], 32
  %v590 = vld [vmem:[%s589] sm:$0xff]
  %592 = vrot.lane.b32.xlu0 %v588, 32
  %v593 = vpop.permute.xlu0 %592
  %v594 = vsel %vm42, %v593, 0
  %596 = vmatprep.subr.mxu0 0.0
  %597 = vmatpush1.msra.mxu0 %v180
  %598 = vmatprep.subr.mxu0 0.0
  %599 = vmatpush1.msra.mxu0 %v181
  %600 = vmatprep.subr.mxu0 0.0
  %601 = vmatpush1.msra.mxu0 %v182
  %602 = vmatprep.subr.mxu0 0.0
  %603 = vmatpush1.msra.mxu0 %v183
  %604 = vmatprep.subr.mxu0 0.0
  %605 = vmatpush1.msra.mxu0 0.0
  %606 = vmatprep.subr.mxu0 0.0
  %607 = vmatpush1.msra.mxu0 0.0
  %608 = vmatprep.subr.mxu0 0.0
  %609 = vmatpush1.msra.mxu0 0.0
  %610 = vmatprep.subr.mxu0 0.0
  %611 = vmatpush1.msra.mxu0 0.0
  %612 = vmatprep.subr.mxu0 0.0
  %613 = vmatpush1.msra.mxu0 0.0
  %614 = vmatprep.subr.mxu0 0.0
  %615 = vmatpush1.msra.mxu0 0.0
  %616 = vmatprep.subr.mxu0 0.0
  %617 = vmatpush1.msra.mxu0 0.0
  %618 = vmatprep.subr.mxu0 0.0
  %619 = vmatpush1.msra.mxu0 0.0
  %620 = vmatprep.subr.mxu0 0.0
  %621 = vmatpush1.msra.mxu0 0.0
  %622 = vmatprep.subr.mxu0 0.0
  %623 = vmatpush1.msra.mxu0 0.0
  %624 = vmatprep.subr.mxu0 0.0
  %625 = vmatpush1.msra.mxu0 0.0
  %626 = vmatprep.subr.mxu0 0.0
  %627 = vmatpush1.msra.mxu0 0.0
  %628 = vmatprep.subr.mxu0 0.0
  %629 = vmatpush1.msra.mxu0 0.0
  %630 = vmatprep.subr.mxu0 0.0
  %631 = vmatpush1.msra.mxu0 0.0
  %632 = vmatprep.subr.mxu0 0.0
  %633 = vmatpush1.msra.mxu0 0.0
  %634 = vmatprep.subr.mxu0 0.0
  %635 = vmatpush1.msra.mxu0 0.0
  %636 = vmatprep.subr.mxu0 0.0
  %637 = vmatpush1.msra.mxu0 0.0
  %638 = vmatprep.subr.mxu0 0.0
  %639 = vmatpush1.msra.mxu0 0.0
  %640 = vmatprep.subr.mxu0 0.0
  %641 = vmatpush1.msra.mxu0 0.0
  %642 = vmatprep.subr.mxu0 0.0
  %643 = vmatpush1.msra.mxu0 0.0
  %644 = vmatprep.subr.mxu0 0.0
  %645 = vmatpush1.msra.mxu0 0.0
  %646 = vmatprep.subr.mxu0 0.0
  %647 = vmatpush1.msra.mxu0 0.0
  %648 = vmatprep.subr.mxu0 0.0
  %649 = vmatpush1.msra.mxu0 0.0
  %650 = vmatprep.subr.mxu0 0.0
  %651 = vmatpush1.msra.mxu0 0.0
  %652 = vmatprep.subr.mxu0 0.0
  %653 = vmatpush1.msra.mxu0 0.0
  %654 = vmatprep.subr.mxu0 0.0
  %655 = vmatpush1.msra.mxu0 0.0
  %656 = vmatprep.subr.mxu0 0.0
  %657 = vmatpush1.msra.mxu0 0.0
  %658 = vmatprep.subr.mxu0 0.0
  %659 = vmatpush1.msra.mxu0 0.0
  %660 = vmatprep.mubr.f32.mxu0 0.0
  %661 = vmatmul.mubr.f32.gmra.mrb[0].mxu0 %v594
  %v662 = vpop.f32.mrb[0].mxu0
  %v663 = vadd.f32 0.0, %v662
  %v664 = vpop.f32.mrb[0].mxu0
  %665 = vdwg.mxu0
  %v666 = vadd.f32 %v590, %v663
  %v667 = vxor.u32 %v666, 2147483648
  %v668 = vmul.f32 %v667, 1.442695
  %v669 = vpow.pop %v668
  %v670 = vadd.f32 %v669, 1.0
  %v671 = vrcp.pop %v670
  %v672 = vmul.f32 1.0, %v671
  %v673 = vtanh.pop %v666
  %v674 = vmul.f32 %v672, %v582
  %676 = vrot.lane.b32.xlu0 %v673, 64
  %v677 = vpop.permute.xlu0 %676
  %v679 = vmul.f32 %v672, %v677
  %681 = vrot.lane.b32.xlu0 %v679, 32
  %v682 = vpop.permute.xlu0 %681
  %v684 = vadd.f32 %v674, %v682
  %v685 = vtanh.pop %v684
  %687 = vrot.lane.b32.xlu0 %v685, 64
  %v688 = vpop.permute.xlu0 %687
  %v690 = vmul.f32 %v672, %v688
  %s691 = scalar_lea.vmem [#allocation2], 40
  %v692 = vld [vmem:[%s691] sm:$0xff]
  %694 = vrot.lane.b32.xlu0 %v690, 32
  %v695 = vpop.permute.xlu0 %694
  %v696 = vsel %vm42, %v695, 0
  %698 = vmatprep.subr.mxu0 0.0
  %699 = vmatpush1.msra.mxu0 %v180
  %700 = vmatprep.subr.mxu0 0.0
  %701 = vmatpush1.msra.mxu0 %v181
  %702 = vmatprep.subr.mxu0 0.0
  %703 = vmatpush1.msra.mxu0 %v182
  %704 = vmatprep.subr.mxu0 0.0
  %705 = vmatpush1.msra.mxu0 %v183
  %706 = vmatprep.subr.mxu0 0.0
  %707 = vmatpush1.msra.mxu0 0.0
  %708 = vmatprep.subr.mxu0 0.0
  %709 = vmatpush1.msra.mxu0 0.0
  %710 = vmatprep.subr.mxu0 0.0
  %711 = vmatpush1.msra.mxu0 0.0
  %712 = vmatprep.subr.mxu0 0.0
  %713 = vmatpush1.msra.mxu0 0.0
  %714 = vmatprep.subr.mxu0 0.0
  %715 = vmatpush1.msra.mxu0 0.0
  %716 = vmatprep.subr.mxu0 0.0
  %717 = vmatpush1.msra.mxu0 0.0
  %718 = vmatprep.subr.mxu0 0.0
  %719 = vmatpush1.msra.mxu0 0.0
  %720 = vmatprep.subr.mxu0 0.0
  %721 = vmatpush1.msra.mxu0 0.0
  %722 = vmatprep.subr.mxu0 0.0
  %723 = vmatpush1.msra.mxu0 0.0
  %724 = vmatprep.subr.mxu0 0.0
  %725 = vmatpush1.msra.mxu0 0.0
  %726 = vmatprep.subr.mxu0 0.0
  %727 = vmatpush1.msra.mxu0 0.0
  %728 = vmatprep.subr.mxu0 0.0
  %729 = vmatpush1.msra.mxu0 0.0
  %730 = vmatprep.subr.mxu0 0.0
  %731 = vmatpush1.msra.mxu0 0.0
  %732 = vmatprep.subr.mxu0 0.0
  %733 = vmatpush1.msra.mxu0 0.0
  %734 = vmatprep.subr.mxu0 0.0
  %735 = vmatpush1.msra.mxu0 0.0
  %736 = vmatprep.subr.mxu0 0.0
  %737 = vmatpush1.msra.mxu0 0.0
  %738 = vmatprep.subr.mxu0 0.0
  %739 = vmatpush1.msra.mxu0 0.0
  %740 = vmatprep.subr.mxu0 0.0
  %741 = vmatpush1.msra.mxu0 0.0
  %742 = vmatprep.subr.mxu0 0.0
  %743 = vmatpush1.msra.mxu0 0.0
  %744 = vmatprep.subr.mxu0 0.0
  %745 = vmatpush1.msra.mxu0 0.0
  %746 = vmatprep.subr.mxu0 0.0
  %747 = vmatpush1.msra.mxu0 0.0
  %748 = vmatprep.subr.mxu0 0.0
  %749 = vmatpush1.msra.mxu0 0.0
  %750 = vmatprep.subr.mxu0 0.0
  %751 = vmatpush1.msra.mxu0 0.0
  %752 = vmatprep.subr.mxu0 0.0
  %753 = vmatpush1.msra.mxu0 0.0
  %754 = vmatprep.subr.mxu0 0.0
  %755 = vmatpush1.msra.mxu0 0.0
  %756 = vmatprep.subr.mxu0 0.0
  %757 = vmatpush1.msra.mxu0 0.0
  %758 = vmatprep.subr.mxu0 0.0
  %759 = vmatpush1.msra.mxu0 0.0
  %760 = vmatprep.subr.mxu0 0.0
  %761 = vmatpush1.msra.mxu0 0.0
  %762 = vmatprep.mubr.f32.mxu0 0.0
  %763 = vmatmul.mubr.f32.gmra.mrb[0].mxu0 %v696
  %v764 = vpop.f32.mrb[0].mxu0
  %v765 = vadd.f32 0.0, %v764
  %v766 = vpop.f32.mrb[0].mxu0
  %767 = vdwg.mxu0
  %v768 = vadd.f32 %v692, %v765
  %v769 = vxor.u32 %v768, 2147483648
  %v770 = vmul.f32 %v769, 1.442695
  %v771 = vpow.pop %v770
  %v772 = vadd.f32 %v771, 1.0
  %v773 = vrcp.pop %v772
  %v774 = vmul.f32 1.0, %v773
  %v775 = vtanh.pop %v768
  %v776 = vmul.f32 %v774, %v684
  %778 = vrot.lane.b32.xlu0 %v775, 64
  %v779 = vpop.permute.xlu0 %778
  %v781 = vmul.f32 %v774, %v779
  %783 = vrot.lane.b32.xlu0 %v781, 32
  %v784 = vpop.permute.xlu0 %783
  %v786 = vadd.f32 %v776, %v784
  %v787 = vtanh.pop %v786
  %789 = vrot.lane.b32.xlu0 %v787, 64
  %v790 = vpop.permute.xlu0 %789
  %v792 = vmul.f32 %v774, %v790
  %s793 = scalar_lea.vmem [#allocation2], 48
  %v794 = vld [vmem:[%s793] sm:$0xff]
  %796 = vrot.lane.b32.xlu0 %v792, 32
  %v797 = vpop.permute.xlu0 %796
  %v798 = vsel %vm42, %v797, 0
  %800 = vmatprep.subr.mxu0 0.0
  %801 = vmatpush1.msra.mxu0 %v180
  %802 = vmatprep.subr.mxu0 0.0
  %803 = vmatpush1.msra.mxu0 %v181
  %804 = vmatprep.subr.mxu0 0.0
  %805 = vmatpush1.msra.mxu0 %v182
  %806 = vmatprep.subr.mxu0 0.0
  %807 = vmatpush1.msra.mxu0 %v183
  %808 = vmatprep.subr.mxu0 0.0
  %809 = vmatpush1.msra.mxu0 0.0
  %810 = vmatprep.subr.mxu0 0.0
  %811 = vmatpush1.msra.mxu0 0.0
  %812 = vmatprep.subr.mxu0 0.0
  %813 = vmatpush1.msra.mxu0 0.0
  %814 = vmatprep.subr.mxu0 0.0
  %815 = vmatpush1.msra.mxu0 0.0
  %816 = vmatprep.subr.mxu0 0.0
  %817 = vmatpush1.msra.mxu0 0.0
  %818 = vmatprep.subr.mxu0 0.0
  %819 = vmatpush1.msra.mxu0 0.0
  %820 = vmatprep.subr.mxu0 0.0
  %821 = vmatpush1.msra.mxu0 0.0
  %822 = vmatprep.subr.mxu0 0.0
  %823 = vmatpush1.msra.mxu0 0.0
  %824 = vmatprep.subr.mxu0 0.0
  %825 = vmatpush1.msra.mxu0 0.0
  %826 = vmatprep.subr.mxu0 0.0
  %827 = vmatpush1.msra.mxu0 0.0
  %828 = vmatprep.subr.mxu0 0.0
  %829 = vmatpush1.msra.mxu0 0.0
  %830 = vmatprep.subr.mxu0 0.0
  %831 = vmatpush1.msra.mxu0 0.0
  %832 = vmatprep.subr.mxu0 0.0
  %833 = vmatpush1.msra.mxu0 0.0
  %834 = vmatprep.subr.mxu0 0.0
  %835 = vmatpush1.msra.mxu0 0.0
  %836 = vmatprep.subr.mxu0 0.0
  %837 = vmatpush1.msra.mxu0 0.0
  %838 = vmatprep.subr.mxu0 0.0
  %839 = vmatpush1.msra.mxu0 0.0
  %840 = vmatprep.subr.mxu0 0.0
  %841 = vmatpush1.msra.mxu0 0.0
  %842 = vmatprep.subr.mxu0 0.0
  %843 = vmatpush1.msra.mxu0 0.0
  %844 = vmatprep.subr.mxu0 0.0
  %845 = vmatpush1.msra.mxu0 0.0
  %846 = vmatprep.subr.mxu0 0.0
  %847 = vmatpush1.msra.mxu0 0.0
  %848 = vmatprep.subr.mxu0 0.0
  %849 = vmatpush1.msra.mxu0 0.0
  %850 = vmatprep.subr.mxu0 0.0
  %851 = vmatpush1.msra.mxu0 0.0
  %852 = vmatprep.subr.mxu0 0.0
  %853 = vmatpush1.msra.mxu0 0.0
  %854 = vmatprep.subr.mxu0 0.0
  %855 = vmatpush1.msra.mxu0 0.0
  %856 = vmatprep.subr.mxu0 0.0
  %857 = vmatpush1.msra.mxu0 0.0
  %858 = vmatprep.subr.mxu0 0.0
  %859 = vmatpush1.msra.mxu0 0.0
  %860 = vmatprep.subr.mxu0 0.0
  %861 = vmatpush1.msra.mxu0 0.0
  %862 = vmatprep.subr.mxu0 0.0
  %863 = vmatpush1.msra.mxu0 0.0
  %864 = vmatprep.mubr.f32.mxu0 0.0
  %865 = vmatmul.mubr.f32.gmra.mrb[0].mxu0 %v798
  %v866 = vpop.f32.mrb[0].mxu0
  %v867 = vadd.f32 0.0, %v866
  %v868 = vpop.f32.mrb[0].mxu0
  %869 = vdwg.mxu0
  %v870 = vadd.f32 %v794, %v867
  %v871 = vxor.u32 %v870, 2147483648
  %v872 = vmul.f32 %v871, 1.442695
  %v873 = vpow.pop %v872
  %v874 = vadd.f32 %v873, 1.0
  %v875 = vrcp.pop %v874
  %v876 = vmul.f32 1.0, %v875
  %v877 = vtanh.pop %v870
  %v878 = vmul.f32 %v876, %v786
  %880 = vrot.lane.b32.xlu0 %v877, 64
  %v881 = vpop.permute.xlu0 %880
  %v883 = vmul.f32 %v876, %v881
  %885 = vrot.lane.b32.xlu0 %v883, 32
  %v886 = vpop.permute.xlu0 %885
  %v888 = vadd.f32 %v878, %v886
  %v889 = vtanh.pop %v888
  %891 = vrot.lane.b32.xlu0 %v889, 64
  %v892 = vpop.permute.xlu0 %891
  %v894 = vmul.f32 %v876, %v892
  %s895 = scalar_lea.vmem [#allocation2], 56
  %v896 = vld [vmem:[%s895] sm:$0xff]
  %898 = vrot.lane.b32.xlu0 %v894, 32
  %v899 = vpop.permute.xlu0 %898
  %v900 = vsel %vm42, %v899, 0
  %902 = vmatprep.subr.mxu0 0.0
  %903 = vmatpush1.msra.mxu0 %v180
  %904 = vmatprep.subr.mxu0 0.0
  %905 = vmatpush1.msra.mxu0 %v181
  %906 = vmatprep.subr.mxu0 0.0
  %907 = vmatpush1.msra.mxu0 %v182
  %908 = vmatprep.subr.mxu0 0.0
  %909 = vmatpush1.msra.mxu0 %v183
  %910 = vmatprep.subr.mxu0 0.0
  %911 = vmatpush1.msra.mxu0 0.0
  %912 = vmatprep.subr.mxu0 0.0
  %913 = vmatpush1.msra.mxu0 0.0
  %914 = vmatprep.subr.mxu0 0.0
  %915 = vmatpush1.msra.mxu0 0.0
  %916 = vmatprep.subr.mxu0 0.0
  %917 = vmatpush1.msra.mxu0 0.0
  %918 = vmatprep.subr.mxu0 0.0
  %919 = vmatpush1.msra.mxu0 0.0
  %920 = vmatprep.subr.mxu0 0.0
  %921 = vmatpush1.msra.mxu0 0.0
  %922 = vmatprep.subr.mxu0 0.0
  %923 = vmatpush1.msra.mxu0 0.0
  %924 = vmatprep.subr.mxu0 0.0
  %925 = vmatpush1.msra.mxu0 0.0
  %926 = vmatprep.subr.mxu0 0.0
  %927 = vmatpush1.msra.mxu0 0.0
  %928 = vmatprep.subr.mxu0 0.0
  %929 = vmatpush1.msra.mxu0 0.0
  %930 = vmatprep.subr.mxu0 0.0
  %931 = vmatpush1.msra.mxu0 0.0
  %932 = vmatprep.subr.mxu0 0.0
  %933 = vmatpush1.msra.mxu0 0.0
  %934 = vmatprep.subr.mxu0 0.0
  %935 = vmatpush1.msra.mxu0 0.0
  %936 = vmatprep.subr.mxu0 0.0
  %937 = vmatpush1.msra.mxu0 0.0
  %938 = vmatprep.subr.mxu0 0.0
  %939 = vmatpush1.msra.mxu0 0.0
  %940 = vmatprep.subr.mxu0 0.0
  %941 = vmatpush1.msra.mxu0 0.0
  %942 = vmatprep.subr.mxu0 0.0
  %943 = vmatpush1.msra.mxu0 0.0
  %944 = vmatprep.subr.mxu0 0.0
  %945 = vmatpush1.msra.mxu0 0.0
  %946 = vmatprep.subr.mxu0 0.0
  %947 = vmatpush1.msra.mxu0 0.0
  %948 = vmatprep.subr.mxu0 0.0
  %949 = vmatpush1.msra.mxu0 0.0
  %950 = vmatprep.subr.mxu0 0.0
  %951 = vmatpush1.msra.mxu0 0.0
  %952 = vmatprep.subr.mxu0 0.0
  %953 = vmatpush1.msra.mxu0 0.0
  %954 = vmatprep.subr.mxu0 0.0
  %955 = vmatpush1.msra.mxu0 0.0
  %956 = vmatprep.subr.mxu0 0.0
  %957 = vmatpush1.msra.mxu0 0.0
  %958 = vmatprep.subr.mxu0 0.0
  %959 = vmatpush1.msra.mxu0 0.0
  %960 = vmatprep.subr.mxu0 0.0
  %961 = vmatpush1.msra.mxu0 0.0
  %962 = vmatprep.subr.mxu0 0.0
  %963 = vmatpush1.msra.mxu0 0.0
  %964 = vmatprep.subr.mxu0 0.0
  %965 = vmatpush1.msra.mxu0 0.0
  %966 = vmatprep.mubr.f32.mxu0 0.0
  %967 = vmatmul.mubr.f32.gmra.mrb[0].mxu0 %v900
  %v968 = vpop.f32.mrb[0].mxu0
  %v969 = vadd.f32 0.0, %v968
  %v970 = vpop.f32.mrb[0].mxu0
  %971 = vdwg.mxu0
  %v972 = vadd.f32 %v896, %v969
  %v973 = vxor.u32 %v972, 2147483648
  %v974 = vmul.f32 %v973, 1.442695
  %v975 = vpow.pop %v974
  %v976 = vadd.f32 %v975, 1.0
  %v977 = vrcp.pop %v976
  %v978 = vmul.f32 1.0, %v977
  %v979 = vtanh.pop %v972
  %v980 = vmul.f32 %v978, %v888
  %982 = vrot.lane.b32.xlu0 %v979, 64
  %v983 = vpop.permute.xlu0 %982
  %v985 = vmul.f32 %v978, %v983
  %987 = vrot.lane.b32.xlu0 %v985, 32
  %v988 = vpop.permute.xlu0 %987
  %v990 = vadd.f32 %v980, %v988
  %v991 = vtanh.pop %v990
  %993 = vrot.lane.b32.xlu0 %v991, 64
  %v994 = vpop.permute.xlu0 %993
  %v996 = vmul.f32 %v978, %v994
  %v997 = vld [vmem:[%s4] sm:$0xff]
  %v998 = vld [vmem:[%s4 + $0x8] sm:$0xff]
  %v999 = vld [vmem:[%s4 + $0x10] sm:$0xff]
  %v1000 = vld [vmem:[%s4 + $0x18] sm:$0xff]
  %v1001 = vld [vmem:[%s5] sm:$0x1]
  %v1003 = vlaneseq
  %v1004 = vshrl.u32 %v1003, 7
  %v1005 = vsub.s32 0, %v1004
  %v1006 = vrot.slane %v1001, %v1005
  %1009 = vrot.lane.b32.xlu0 %v996, 32
  %v1010 = vpop.permute.xlu0 %1009
  %v1011 = vsel %vm42, %v1010, 0
  %1013 = vmatprep.subr.mxu0 0.0
  %1014 = vmatpush1.msra.mxu0 %v997
  %1015 = vmatprep.subr.mxu0 0.0
  %1016 = vmatpush1.msra.mxu0 %v998
  %1017 = vmatprep.subr.mxu0 0.0
  %1018 = vmatpush1.msra.mxu0 %v999
  %1019 = vmatprep.subr.mxu0 0.0
  %1020 = vmatpush1.msra.mxu0 %v1000
  %1021 = vmatprep.subr.mxu0 0.0
  %1022 = vmatpush1.msra.mxu0 0.0
  %1023 = vmatprep.subr.mxu0 0.0
  %1024 = vmatpush1.msra.mxu0 0.0
  %1025 = vmatprep.subr.mxu0 0.0
  %1026 = vmatpush1.msra.mxu0 0.0
  %1027 = vmatprep.subr.mxu0 0.0
  %1028 = vmatpush1.msra.mxu0 0.0
  %1029 = vmatprep.subr.mxu0 0.0
  %1030 = vmatpush1.msra.mxu0 0.0
  %1031 = vmatprep.subr.mxu0 0.0
  %1032 = vmatpush1.msra.mxu0 0.0
  %1033 = vmatprep.subr.mxu0 0.0
  %1034 = vmatpush1.msra.mxu0 0.0
  %1035 = vmatprep.subr.mxu0 0.0
  %1036 = vmatpush1.msra.mxu0 0.0
  %1037 = vmatprep.subr.mxu0 0.0
  %1038 = vmatpush1.msra.mxu0 0.0
  %1039 = vmatprep.subr.mxu0 0.0
  %1040 = vmatpush1.msra.mxu0 0.0
  %1041 = vmatprep.subr.mxu0 0.0
  %1042 = vmatpush1.msra.mxu0 0.0
  %1043 = vmatprep.subr.mxu0 0.0
  %1044 = vmatpush1.msra.mxu0 0.0
  %1045 = vmatprep.subr.mxu0 0.0
  %1046 = vmatpush1.msra.mxu0 0.0
  %1047 = vmatprep.subr.mxu0 0.0
  %1048 = vmatpush1.msra.mxu0 0.0
  %1049 = vmatprep.subr.mxu0 0.0
  %1050 = vmatpush1.msra.mxu0 0.0
  %1051 = vmatprep.subr.mxu0 0.0
  %1052 = vmatpush1.msra.mxu0 0.0
  %1053 = vmatprep.subr.mxu0 0.0
  %1054 = vmatpush1.msra.mxu0 0.0
  %1055 = vmatprep.subr.mxu0 0.0
  %1056 = vmatpush1.msra.mxu0 0.0
  %1057 = vmatprep.subr.mxu0 0.0
  %1058 = vmatpush1.msra.mxu0 0.0
  %1059 = vmatprep.subr.mxu0 0.0
  %1060 = vmatpush1.msra.mxu0 0.0
  %1061 = vmatprep.subr.mxu0 0.0
  %1062 = vmatpush1.msra.mxu0 0.0
  %1063 = vmatprep.subr.mxu0 0.0
  %1064 = vmatpush1.msra.mxu0 0.0
  %1065 = vmatprep.subr.mxu0 0.0
  %1066 = vmatpush1.msra.mxu0 0.0
  %1067 = vmatprep.subr.mxu0 0.0
  %1068 = vmatpush1.msra.mxu0 0.0
  %1069 = vmatprep.subr.mxu0 0.0
  %1070 = vmatpush1.msra.mxu0 0.0
  %1071 = vmatprep.subr.mxu0 0.0
  %1072 = vmatpush1.msra.mxu0 0.0
  %1073 = vmatprep.subr.mxu0 0.0
  %1074 = vmatpush1.msra.mxu0 0.0
  %1075 = vmatprep.subr.mxu0 0.0
  %1076 = vmatpush1.msra.mxu0 0.0
  %1077 = vmatprep.mubr.f32.mxu0 0.0
  %1078 = vmatmul.mubr.f32.gmra.mrb[0].mxu0 %v1011
  %v1079 = vpop.f32.mrb[0].mxu0
  %v1080 = vadd.f32 %v1006, %v1079
  %v1081 = vpop.f32.mrb[0].mxu0
  %1082 = vdwg.mxu0
  %1083 = vst [vmem:[%s6] sm:$0xff] %v1080
  // Predicated region
  $region26: #{mylstm_forward.1} parent=0 // pred_check
    _
  $region27: #{mylstm_forward.1} parent=0 // pred_check_branch
    %1085 = sbr.rel (0) target = $region29
  $region28: #{mylstm_forward.1} parent=0 // pred_region
    _
  $region29: #{mylstm_forward.1} parent=0 // pred_fallthru
    _
  // Predicated region
  $region30: #{mylstm_forward.1} parent=0 // pred_check
    _
  $region31: #{mylstm_forward.1} parent=0 // pred_check_branch
    %1087 = sbr.rel (0) target = $region33
  $region32: #{mylstm_forward.1} parent=0 // pred_region
    _
  $region33: #{mylstm_forward.1} parent=0 // pred_fallthru
    _

</llo_original>
